<compile_context>
chip_gen: v7x
topology: tpu7x:2x2x1
jax: 0.10.0
libtpu: 0.0.40
codegen_flags: <defaults>
</compile_context>

<pallas_src>
import jax
import jax.numpy as jnp
from jax.experimental import pallas as pl
from jax.experimental.pallas import tpu as pltpu


def sa_layer_1_kernel(xh_ref, xo_ref, w_ref, bv_ref, x_ref, attn_ref):
    # xh_ref: (B, C, Nh)   xo_ref: (B, C, No)   -- PyTorch NCW, full arrays in VMEM
    # w_ref:  (Cq + C, C)  rows [0:Cq] = shared q/k conv weight, rows [Cq:] = v conv weight
    # bv_ref: (C, 1)       v conv bias
    B, C, Nh = xh_ref.shape
    No = xo_ref.shape[2]
    Cq = w_ref.shape[0] - C

    w_all = w_ref[...]                  # (Cq + C, C)
    bv = bv_ref[...]                    # (C, 1)

    # Fuse every 1x1-conv projection (q on xh, k/v on xo, both batches) into a
    # single MXU issue: concatenate all point sets along the lane dimension.
    cols = [xh_ref[b] for b in range(B)] + [xo_ref[b] for b in range(B)]
    x_cat = jnp.concatenate(cols, axis=1)                                # (C, B*Nh + B*No)
    proj = jnp.dot(w_all, x_cat, preferred_element_type=jnp.float32)     # (Cq+C, B*Nh + B*No)

    for b in range(B):                  # B is tiny & static: fully unrolled
        q_t = proj[:Cq, b * Nh:(b + 1) * Nh]                             # (Cq, Nh)
        off = B * Nh + b * No
        k = proj[:Cq, off:off + No]                                      # (Cq, No)
        v = proj[Cq:, off:off + No] + bv                                 # (C,  No)

        # alpha[h, o] = sum_cq q_t[cq, h] * k[cq, o]   (== torch.bmm(Q, K))
        alpha = jax.lax.dot_general(
            q_t, k, (((0,), (0,)), ((), ())),
            preferred_element_type=jnp.float32)                          # (Nh, No)

        # attention = alpha / (1e-9 + sum over Nh)   -- NO softmax in SA_Layer_1
        denom = 1e-9 + jnp.sum(alpha, axis=0, keepdims=True)             # (1, No)
        attention = alpha * pl.reciprocal(denom, approx=False)           # (Nh, No)

        # x[c, h] = sum_o v[c, o] * attention[h, o]  -> already NCW (C, Nh)
        x_out = jax.lax.dot_general(
            v, attention, (((1,), (1,)), ((), ())),
            preferred_element_type=jnp.float32)                          # (C, Nh)

        x_ref[b] = x_out
        attn_ref[b] = attention


def finger_encoder_forward(x1, x2, w_qk, w_v, b_v):
    """x1: (B, C, Nh), x2: (B, C, No) in PyTorch NCW layout (float32).
    w_qk: (C//4, C) shared q/k Conv1d weight (kernel dim squeezed),
    w_v:  (C, C)    v Conv1d weight, b_v: (C,) its bias.
    Returns (x, attention): x (B, C, Nh), attention (B, Nh, No)."""
    B, C, Nh = x1.shape
    _, _, No = x2.shape
    Cq = C // 4

    # One-time weight prep only; no per-call activation transposes.
    w_all = jnp.concatenate([w_qk, w_v], axis=0).astype(jnp.float32)     # (Cq + C, C)
    bv2 = b_v.reshape(C, 1).astype(jnp.float32)

    f32 = jnp.dtype(jnp.float32).itemsize
    cost = pl.CostEstimate(
        flops=2 * (Cq + C) * C * B * (Nh + No)       # fused projection matmul
              + 2 * B * Cq * Nh * No                 # alpha
              + 2 * B * C * Nh * No,                 # x_out
        transcendentals=B * No,                      # reciprocal of denom
        bytes_accessed=f32 * (B * C * Nh + B * C * No + (Cq + C) * C + C
                              + B * C * Nh + B * Nh * No),
    )

    out_shape = (
        jax.ShapeDtypeStruct((B, C, Nh), jnp.float32),
        jax.ShapeDtypeStruct((B, Nh, No), jnp.float32),
    )

    vmem = pltpu.MemorySpace.VMEM
    x, attention = pl.pallas_call(
        sa_layer_1_kernel,
        out_shape=out_shape,
        in_specs=[pl.BlockSpec(memory_space=vmem)] * 4,
        out_specs=(pl.BlockSpec(memory_space=vmem),
                   pl.BlockSpec(memory_space=vmem)),
        cost_estimate=cost,
    )(x1.astype(jnp.float32), x2.astype(jnp.float32), w_all, bv2)
    return x, attention


def reference_forward(x1, x2, w_qk, w_v, b_v):
    """Pure-JAX reference with the exact PyTorch SA_Layer_1 semantics."""
    hi = jax.lax.Precision.HIGHEST
    q = jnp.einsum("qc,bcn->bqn", w_qk, x1, precision=hi)                      # (B, Cq, Nh)
    k = jnp.einsum("qc,bcn->bqn", w_qk, x2, precision=hi)                      # (B, Cq, No)
    v = jnp.einsum("oc,bcn->bon", w_v, x2, precision=hi) + b_v[None, :, None]  # (B, C, No)
    alpha = jnp.einsum("bqh,bqo->bho", q, k, precision=hi)                     # (B, Nh, No)
    attention = alpha / (1e-9 + jnp.sum(alpha, axis=1, keepdims=True))
    x = jnp.einsum("bho,bco->bch", attention, v, precision=hi)                 # (B, C, Nh)
    return x, attention


if __name__ == "__main__":
    B, C, Nh, No = 2, 32, 16, 24

    # Positive-valued inputs/weights keep the (signed-sum + 1e-9) attention
    # denominator far from zero, so the numeric check is well-conditioned.
    key = jax.random.PRNGKey(0)
    kx1, kx2, kw1, kw2, kb = jax.random.split(key, 5)
    x1 = jax.random.uniform(kx1, (B, C, Nh), jnp.float32, 0.1, 1.0)        # xyz_hand
    x2 = jax.random.uniform(kx2, (B, C, No), jnp.float32, 0.1, 1.0)        # xyz_object
    w_qk = jax.random.uniform(kw1, (C // 4, C), jnp.float32, 0.01, 0.1)    # shared q/k weight
    w_v = jax.random.uniform(kw2, (C, C), jnp.float32, 0.01, 0.1)          # v weight
    b_v = jax.random.uniform(kb, (C,), jnp.float32, 0.0, 0.1)              # v bias

    x_out, attn_out = finger_encoder_forward(x1, x2, w_qk, w_v, b_v)
    jax.block_until_ready((x_out, attn_out))

    x_ref, attn_ref = reference_forward(x1, x2, w_qk, w_v, b_v)

    assert x_out.shape == (B, C, Nh)
    assert attn_out.shape == (B, Nh, No)
    assert jnp.allclose(x_out, x_ref, atol=1e-3, rtol=1e-3), float(
        jnp.max(jnp.abs(x_out - x_ref)))
    assert jnp.allclose(attn_out, attn_ref, atol=1e-3, rtol=1e-3), float(
        jnp.max(jnp.abs(attn_out - attn_ref)))

    print("KERNEL_OK")
</pallas_src>

<mosaic_0001>
module attributes {stable_mosaic.version = 11 : i64} {
  func.func @sa_layer_1_kernel(%arg0: memref<2x32x16xf32, #tpu.memory_space<vmem>>, %arg1: memref<2x32x24xf32, #tpu.memory_space<vmem>>, %arg2: memref<40x32xf32, #tpu.memory_space<vmem>>, %arg3: memref<32x1xf32, #tpu.memory_space<vmem>>, %arg4: memref<2x32x16xf32, #tpu.memory_space<vmem>>, %arg5: memref<2x16x24xf32, #tpu.memory_space<vmem>>) attributes {dimension_semantics = [], scalar_prefetch = 0 : i64, scratch_operands = 0 : i64, tpu.core_type = #tpu.core_type<tc>} {
    %c0 = arith.constant 0 : index
    %c0_0 = arith.constant 0 : index
    %0 = vector.load %arg2[%c0, %c0_0] : memref<40x32xf32, #tpu.memory_space<vmem>>, vector<40x32xf32>
    %c0_1 = arith.constant 0 : index
    %c0_2 = arith.constant 0 : index
    %1 = vector.load %arg3[%c0_1, %c0_2] : memref<32x1xf32, #tpu.memory_space<vmem>>, vector<32x1xf32>
    %c0_3 = arith.constant 0 : index
    %c0_4 = arith.constant 0 : index
    %c0_5 = arith.constant 0 : index
    %2 = vector.load %arg0[%c0_3, %c0_4, %c0_5] : memref<2x32x16xf32, #tpu.memory_space<vmem>>, vector<1x32x16xf32>
    %3 = vector.shape_cast %2 : vector<1x32x16xf32> to vector<32x16xf32>
    %c1 = arith.constant 1 : index
    %c0_6 = arith.constant 0 : index
    %c0_7 = arith.constant 0 : index
    %4 = vector.load %arg0[%c1, %c0_6, %c0_7] : memref<2x32x16xf32, #tpu.memory_space<vmem>>, vector<1x32x16xf32>
    %5 = vector.shape_cast %4 : vector<1x32x16xf32> to vector<32x16xf32>
    %c0_8 = arith.constant 0 : index
    %c0_9 = arith.constant 0 : index
    %c0_10 = arith.constant 0 : index
    %6 = vector.load %arg1[%c0_8, %c0_9, %c0_10] : memref<2x32x24xf32, #tpu.memory_space<vmem>>, vector<1x32x24xf32>
    %7 = vector.shape_cast %6 : vector<1x32x24xf32> to vector<32x24xf32>
    %c1_11 = arith.constant 1 : index
    %c0_12 = arith.constant 0 : index
    %c0_13 = arith.constant 0 : index
    %8 = vector.load %arg1[%c1_11, %c0_12, %c0_13] : memref<2x32x24xf32, #tpu.memory_space<vmem>>, vector<1x32x24xf32>
    %9 = vector.shape_cast %8 : vector<1x32x24xf32> to vector<32x24xf32>
    %10 = tpu.concatenate %3, %5, %7, %9 in 1 : vector<32x16xf32>, vector<32x16xf32>, vector<32x24xf32>, vector<32x24xf32> -> vector<32x80xf32>
    %cst = arith.constant dense<0.000000e+00> : vector<40x80xf32>
    %11 = tpu.matmul %0, %10, %cst {dimension_numbers = #tpu.dot_dimension_numbers<[1], [0], [0], [1], [0, 0, 1, 1], [], []>} : vector<40x32xf32>, vector<32x80xf32>, vector<40x80xf32> -> vector<40x80xf32>
    %12 = vector.extract_strided_slice %11 {offsets = [0, 0], sizes = [8, 16], strides = [1, 1]} : vector<40x80xf32> to vector<8x16xf32>
    %13 = vector.extract_strided_slice %11 {offsets = [0, 32], sizes = [8, 24], strides = [1, 1]} : vector<40x80xf32> to vector<8x24xf32>
    %14 = vector.extract_strided_slice %11 {offsets = [8, 32], sizes = [32, 24], strides = [1, 1]} : vector<40x80xf32> to vector<32x24xf32>
    %15 = vector.broadcast %1 : vector<32x1xf32> to vector<32x24xf32>
    %16 = arith.addf %14, %15 : vector<32x24xf32>
    %cst_14 = arith.constant dense<0.000000e+00> : vector<16x24xf32>
    %17 = tpu.matmul %12, %13, %cst_14 {dimension_numbers = #tpu.dot_dimension_numbers<[0], [0], [1], [1], [0, 1, 1, 1], [], []>} : vector<8x16xf32>, vector<8x24xf32>, vector<16x24xf32> -> vector<16x24xf32>
    %cst_15 = arith.constant dense<0.000000e+00> : vector<24xf32>
    %18 = vector.multi_reduction <add>, %17, %cst_15 [0] : vector<16x24xf32> to vector<24xf32>
    %19 = vector.shape_cast %18 : vector<24xf32> to vector<1x24xf32>
    %cst_16 = arith.constant 9.99999971E-10 : f32
    %20 = vector.broadcast %cst_16 : f32 to vector<1x24xf32>
    %21 = arith.addf %20, %19 : vector<1x24xf32>
    %22 = tpu.reciprocal %21 : vector<1x24xf32> -> vector<1x24xf32>
    %23 = vector.broadcast %22 : vector<1x24xf32> to vector<16x24xf32>
    %24 = arith.mulf %17, %23 : vector<16x24xf32>
    %cst_17 = arith.constant dense<0.000000e+00> : vector<32x16xf32>
    %25 = tpu.matmul %16, %24, %cst_17 {dimension_numbers = #tpu.dot_dimension_numbers<[1], [1], [0], [0], [0, 0, 1, 0], [], []>} : vector<32x24xf32>, vector<16x24xf32>, vector<32x16xf32> -> vector<32x16xf32>
    %c0_18 = arith.constant 0 : index
    %c0_19 = arith.constant 0 : index
    %c0_20 = arith.constant 0 : index
    %26 = vector.load %arg4[%c0_18, %c0_19, %c0_20] : memref<2x32x16xf32, #tpu.memory_space<vmem>>, vector<1x32x16xf32>
    %27 = vector.shape_cast %26 : vector<1x32x16xf32> to vector<32x16xf32>
    %28 = vector.shape_cast %25 : vector<32x16xf32> to vector<1x32x16xf32>
    tpu.vector_store %arg4[%c0_18, %c0_19, %c0_20], %28 {strides = array<i32>} : memref<2x32x16xf32, #tpu.memory_space<vmem>>, vector<1x32x16xf32>,
    %c0_21 = arith.constant 0 : index
    %c0_22 = arith.constant 0 : index
    %c0_23 = arith.constant 0 : index
    %29 = vector.load %arg5[%c0_21, %c0_22, %c0_23] : memref<2x16x24xf32, #tpu.memory_space<vmem>>, vector<1x16x24xf32>
    %30 = vector.shape_cast %29 : vector<1x16x24xf32> to vector<16x24xf32>
    %31 = vector.shape_cast %24 : vector<16x24xf32> to vector<1x16x24xf32>
    tpu.vector_store %arg5[%c0_21, %c0_22, %c0_23], %31 {strides = array<i32>} : memref<2x16x24xf32, #tpu.memory_space<vmem>>, vector<1x16x24xf32>,
    %32 = vector.extract_strided_slice %11 {offsets = [0, 16], sizes = [8, 16], strides = [1, 1]} : vector<40x80xf32> to vector<8x16xf32>
    %33 = vector.extract_strided_slice %11 {offsets = [0, 56], sizes = [8, 24], strides = [1, 1]} : vector<40x80xf32> to vector<8x24xf32>
    %34 = vector.extract_strided_slice %11 {offsets = [8, 56], sizes = [32, 24], strides = [1, 1]} : vector<40x80xf32> to vector<32x24xf32>
    %35 = vector.broadcast %1 : vector<32x1xf32> to vector<32x24xf32>
    %36 = arith.addf %34, %35 : vector<32x24xf32>
    %cst_24 = arith.constant dense<0.000000e+00> : vector<16x24xf32>
    %37 = tpu.matmul %32, %33, %cst_24 {dimension_numbers = #tpu.dot_dimension_numbers<[0], [0], [1], [1], [0, 1, 1, 1], [], []>} : vector<8x16xf32>, vector<8x24xf32>, vector<16x24xf32> -> vector<16x24xf32>
    %cst_25 = arith.constant dense<0.000000e+00> : vector<24xf32>
    %38 = vector.multi_reduction <add>, %37, %cst_25 [0] : vector<16x24xf32> to vector<24xf32>
    %39 = vector.shape_cast %38 : vector<24xf32> to vector<1x24xf32>
    %cst_26 = arith.constant 9.99999971E-10 : f32
    %40 = vector.broadcast %cst_26 : f32 to vector<1x24xf32>
    %41 = arith.addf %40, %39 : vector<1x24xf32>
    %42 = tpu.reciprocal %41 : vector<1x24xf32> -> vector<1x24xf32>
    %43 = vector.broadcast %42 : vector<1x24xf32> to vector<16x24xf32>
    %44 = arith.mulf %37, %43 : vector<16x24xf32>
    %cst_27 = arith.constant dense<0.000000e+00> : vector<32x16xf32>
    %45 = tpu.matmul %36, %44, %cst_27 {dimension_numbers = #tpu.dot_dimension_numbers<[1], [1], [0], [0], [0, 0, 1, 0], [], []>} : vector<32x24xf32>, vector<16x24xf32>, vector<32x16xf32> -> vector<32x16xf32>
    %c1_28 = arith.constant 1 : index
    %c0_29 = arith.constant 0 : index
    %c0_30 = arith.constant 0 : index
    %46 = vector.load %arg4[%c1_28, %c0_29, %c0_30] : memref<2x32x16xf32, #tpu.memory_space<vmem>>, vector<1x32x16xf32>
    %47 = vector.shape_cast %46 : vector<1x32x16xf32> to vector<32x16xf32>
    %48 = vector.shape_cast %45 : vector<32x16xf32> to vector<1x32x16xf32>
    tpu.vector_store %arg4[%c1_28, %c0_29, %c0_30], %48 {strides = array<i32>} : memref<2x32x16xf32, #tpu.memory_space<vmem>>, vector<1x32x16xf32>,
    %c1_31 = arith.constant 1 : index
    %c0_32 = arith.constant 0 : index
    %c0_33 = arith.constant 0 : index
    %49 = vector.load %arg5[%c1_31, %c0_32, %c0_33] : memref<2x16x24xf32, #tpu.memory_space<vmem>>, vector<1x16x24xf32>
    %50 = vector.shape_cast %49 : vector<1x16x24xf32> to vector<16x24xf32>
    %51 = vector.shape_cast %44 : vector<16x24xf32> to vector<1x16x24xf32>
    tpu.vector_store %arg5[%c1_31, %c0_32, %c0_33], %51 {strides = array<i32>} : memref<2x16x24xf32, #tpu.memory_space<vmem>>, vector<1x16x24xf32>,
    return
  }
}

</mosaic_0001>

<llo_original>
// kernel: tpu_custom_call.1
$region0: #{tpu_custom_call.1}
  #allocation0 [shape = 'u32[]', space=smem, size = 0x4, offset = 0x4, fixed_abs, tag = 'smem constant byte address 0x4 - core index']
  #allocation1 [shape = 'u32[144,128]{1,0:T(1,128)}', space=vmem, size = 0x12000, scoped, tag = 'internal scratch']
  %s0 = inlined_call_operand.vmem [shape: f32[2,32,16], index: 0, kind: input, shape index: {}]
  %s1 = inlined_call_operand.vmem [shape: f32[2,32,24], index: 1, kind: input, shape index: {}]
  %s2 = inlined_call_operand.vmem [shape: f32[40,32], index: 2, kind: input, shape index: {}]
  %s3 = inlined_call_operand.vmem [shape: f32[32,1], index: 3, kind: input, shape index: {}]
  %s4 = inlined_call_operand.vmem [shape: f32[2,32,16], index: 4, kind: output, shape index: {0}]
  %s5 = inlined_call_operand.hbm [shape: f32[2,16,24], index: 5, kind: output, shape index: {1}]
  %6 = xla_tuple %s4, %s5
  %s7 = sld [smem:[#allocation0]]
  $region34: #{tpu_custom_call.1} parent=0
    _
  %s9 = ssub.s32 1, %s7
  %s10 = scalar_select 0, %s9, %s7
  $region1: #{tpu_custom_call.1} parent=0
    #allocation2 [shape = 'u8[16384]{0}', space=vmem, size = 0x4000, scoped, tag = 'output window, operand 1, single buffered']
    #allocation3 [shape = 's32[1]{0}', space=sflag, size = 0x4, scoped, tag = 'scoped memory for tpu_custom_call.1']
    %11 = vsyncpa [#allocation3], 0
    // Predicated region
    $region2: #{tpu_custom_call.1} parent=1 // pred_check
      _
    $region3: #{tpu_custom_call.1} parent=1 // pred_check_branch
      %13 = sbr.rel (0) target = $region5
    $region4: #{tpu_custom_call.1} parent=1 // pred_region
      _
    $region5: #{tpu_custom_call.1} parent=1 // pred_fallthru
      _
    // Predicated region
    $region6: #{tpu_custom_call.1} parent=1 // pred_check
      _
    $region7: #{tpu_custom_call.1} parent=1 // pred_check_branch
      %15 = sbr.rel (0) target = $region9
    $region8: #{tpu_custom_call.1} parent=1 // pred_region
      _
    $region9: #{tpu_custom_call.1} parent=1 // pred_fallthru
      _
    // Predicated region
    $region10: #{tpu_custom_call.1} parent=1 // pred_check
      _
    $region11: #{tpu_custom_call.1} parent=1 // pred_check_branch
      %17 = sbr.rel (0) target = $region13
    $region12: #{tpu_custom_call.1} parent=1 // pred_region
      _
    $region13: #{tpu_custom_call.1} parent=1 // pred_fallthru
      _
    // Predicated region
    $region14: #{tpu_custom_call.1} parent=1 // pred_check
      _
    $region15: #{tpu_custom_call.1} parent=1 // pred_check_branch
      %19 = sbr.rel (0) target = $region17
    $region16: #{tpu_custom_call.1} parent=1 // pred_region
      _
    $region17: #{tpu_custom_call.1} parent=1 // pred_fallthru
      _
    %v20 = vld [vmem:[%s2] sm:$0xff]
    %v21 = vld [vmem:[%s2 + $0x8] sm:$0xff]
    %v22 = vld [vmem:[%s2 + $0x10] sm:$0xff]
    %v23 = vld [vmem:[%s2 + $0x18] sm:$0xff]
    %v24 = vld [vmem:[%s2 + $0x20] sm:$0xff]
    %v25 = vld [vmem:[%s3] sm:$0xff]
    %v26 = vld [vmem:[%s3 + $0x8] sm:$0xff]
    %v27 = vld [vmem:[%s3 + $0x10] sm:$0xff]
    %v28 = vld [vmem:[%s3 + $0x18] sm:$0xff]
    %v29 = vld [vmem:[%s0] sm:$0xff]
    %v30 = vld [vmem:[%s0 + $0x8] sm:$0xff]
    %v31 = vld [vmem:[%s0 + $0x10] sm:$0xff]
    %v32 = vld [vmem:[%s0 + $0x18] sm:$0xff]
    %s33 = scalar_lea.vmem %s0, 32
    %v34 = vld [vmem:[%s33] sm:$0xff]
    %v35 = vld [vmem:[%s33 + $0x8] sm:$0xff]
    %v36 = vld [vmem:[%s33 + $0x10] sm:$0xff]
    %v37 = vld [vmem:[%s33 + $0x18] sm:$0xff]
    %v38 = vld [vmem:[%s1] sm:$0xff]
    %v39 = vld [vmem:[%s1 + $0x8] sm:$0xff]
    %v40 = vld [vmem:[%s1 + $0x10] sm:$0xff]
    %v41 = vld [vmem:[%s1 + $0x18] sm:$0xff]
    %s42 = scalar_lea.vmem %s1, 32
    %v43 = vld [vmem:[%s42] sm:$0xff]
    %v44 = vld [vmem:[%s42 + $0x8] sm:$0xff]
    %v45 = vld [vmem:[%s42 + $0x10] sm:$0xff]
    %v46 = vld [vmem:[%s42 + $0x18] sm:$0xff]
    %51 = vrot.lane.b32.xlu0 %v34, 16
    %v52 = vpop.permute.xlu0 %51
    %53 = vrot.lane.b32.xlu0 %v35, 16
    %v54 = vpop.permute.xlu0 %53
    %55 = vrot.lane.b32.xlu0 %v36, 16
    %v56 = vpop.permute.xlu0 %55
    %57 = vrot.lane.b32.xlu0 %v37, 16
    %v58 = vpop.permute.xlu0 %57
    %67 = vrot.lane.b32.xlu0 %v38, 32
    %v68 = vpop.permute.xlu0 %67
    %69 = vrot.lane.b32.xlu0 %v39, 32
    %v70 = vpop.permute.xlu0 %69
    %71 = vrot.lane.b32.xlu0 %v40, 32
    %v72 = vpop.permute.xlu0 %71
    %73 = vrot.lane.b32.xlu0 %v41, 32
    %v74 = vpop.permute.xlu0 %73
    %83 = vrot.lane.b32.xlu0 %v43, 56
    %v84 = vpop.permute.xlu0 %83
    %85 = vrot.lane.b32.xlu0 %v44, 56
    %v86 = vpop.permute.xlu0 %85
    %87 = vrot.lane.b32.xlu0 %v45, 56
    %v88 = vpop.permute.xlu0 %87
    %89 = vrot.lane.b32.xlu0 %v46, 56
    %v90 = vpop.permute.xlu0 %89
    %vm95 = vcmask 130048
    %v96 = vsel %vm95, %v29, %v52
    %v97 = vsel %vm95, %v30, %v54
    %v98 = vsel %vm95, %v31, %v56
    %v99 = vsel %vm95, %v32, %v58
    %vm100 = vcmask 261120
    %v101 = vsel %vm100, %v96, %v68
    %v102 = vsel %vm100, %v97, %v70
    %v103 = vsel %vm100, %v98, %v72
    %v104 = vsel %vm100, %v99, %v74
    %vm105 = vcmask 457728
    %v106 = vsel %vm105, %v101, %v84
    %v107 = vsel %vm105, %v102, %v86
    %v108 = vsel %vm105, %v103, %v88
    %v109 = vsel %vm105, %v104, %v90
    %v111 = vsel %vm100, %v20, 0
    %v114 = vsel %vm100, %v21, 0
    %v117 = vsel %vm100, %v22, 0
    %v120 = vsel %vm100, %v23, 0
    %v123 = vsel %vm100, %v24, 0
    %125 = vmatprep.subr.mxu0 0.0
    %126 = vmatpush1.msra.mxu0 %v106
    %127 = vmatprep.subr.mxu0 0.0
    %128 = vmatpush1.msra.mxu0 %v107
    %129 = vmatprep.subr.mxu0 0.0
    %130 = vmatpush1.msra.mxu0 %v108
    %131 = vmatprep.subr.mxu0 0.0
    %132 = vmatpush1.msra.mxu0 %v109
    %133 = vmatprep.subr.mxu0 0.0
    %134 = vmatpush1.msra.mxu0 0.0
    %135 = vmatprep.subr.mxu0 0.0
    %136 = vmatpush1.msra.mxu0 0.0
    %137 = vmatprep.subr.mxu0 0.0
    %138 = vmatpush1.msra.mxu0 0.0
    %139 = vmatprep.subr.mxu0 0.0
    %140 = vmatpush1.msra.mxu0 0.0
    %141 = vmatprep.subr.mxu0 0.0
    %142 = vmatpush1.msra.mxu0 0.0
    %143 = vmatprep.subr.mxu0 0.0
    %144 = vmatpush1.msra.mxu0 0.0
    %145 = vmatprep.subr.mxu0 0.0
    %146 = vmatpush1.msra.mxu0 0.0
    %147 = vmatprep.subr.mxu0 0.0
    %148 = vmatpush1.msra.mxu0 0.0
    %149 = vmatprep.subr.mxu0 0.0
    %150 = vmatpush1.msra.mxu0 0.0
    %151 = vmatprep.subr.mxu0 0.0
    %152 = vmatpush1.msra.mxu0 0.0
    %153 = vmatprep.subr.mxu0 0.0
    %154 = vmatpush1.msra.mxu0 0.0
    %155 = vmatprep.subr.mxu0 0.0
    %156 = vmatpush1.msra.mxu0 0.0
    %157 = vmatprep.subr.mxu0 0.0
    %158 = vmatpush1.msra.mxu0 0.0
    %159 = vmatprep.subr.mxu0 0.0
    %160 = vmatpush1.msra.mxu0 0.0
    %161 = vmatprep.subr.mxu0 0.0
    %162 = vmatpush1.msra.mxu0 0.0
    %163 = vmatprep.subr.mxu0 0.0
    %164 = vmatpush1.msra.mxu0 0.0
    %165 = vmatprep.subr.mxu0 0.0
    %166 = vmatpush1.msra.mxu0 0.0
    %167 = vmatprep.subr.mxu0 0.0
    %168 = vmatpush1.msra.mxu0 0.0
    %169 = vmatprep.subr.mxu0 0.0
    %170 = vmatpush1.msra.mxu0 0.0
    %171 = vmatprep.subr.mxu0 0.0
    %172 = vmatpush1.msra.mxu0 0.0
    %173 = vmatprep.subr.mxu0 0.0
    %174 = vmatpush1.msra.mxu0 0.0
    %175 = vmatprep.subr.mxu0 0.0
    %176 = vmatpush1.msra.mxu0 0.0
    %177 = vmatprep.subr.mxu0 0.0
    %178 = vmatpush1.msra.mxu0 0.0
    %179 = vmatprep.subr.mxu0 0.0
    %180 = vmatpush1.msra.mxu0 0.0
    %181 = vmatprep.subr.mxu0 0.0
    %182 = vmatpush1.msra.mxu0 0.0
    %183 = vmatprep.subr.mxu0 0.0
    %184 = vmatpush1.msra.mxu0 0.0
    %185 = vmatprep.subr.mxu0 0.0
    %186 = vmatpush1.msra.mxu0 0.0
    %187 = vmatprep.subr.mxu0 0.0
    %188 = vmatpush1.msra.mxu0 0.0
    %189 = vmatprep.mubr.f32.mxu0 0.0
    %190 = vmatmul.mubr.f32.gmra.mrb[0].mxu0 %v111
    %v191 = vpop.f32.mrb[0].mxu0
    %v192 = vadd.f32 0.0, %v191
    %v193 = vpop.f32.mrb[0].mxu0
    %194 = vmatprep.mubr.f32.mxu0 0.0
    %195 = vmatmul.mubr.f32.gmra.mrb[0].mxu0 %v114
    %v196 = vpop.f32.mrb[0].mxu0
    %v197 = vadd.f32 0.0, %v196
    %v198 = vpop.f32.mrb[0].mxu0
    %199 = vmatprep.mubr.f32.mxu0 0.0
    %200 = vmatmul.mubr.f32.gmra.mrb[0].mxu0 %v117
    %v201 = vpop.f32.mrb[0].mxu0
    %v202 = vadd.f32 0.0, %v201
    %v203 = vpop.f32.mrb[0].mxu0
    %204 = vmatprep.mubr.f32.mxu0 0.0
    %205 = vmatmul.mubr.f32.gmra.mrb[0].mxu0 %v120
    %v206 = vpop.f32.mrb[0].mxu0
    %v207 = vadd.f32 0.0, %v206
    %v208 = vpop.f32.mrb[0].mxu0
    %209 = vmatprep.mubr.f32.mxu0 0.0
    %210 = vmatmul.mubr.f32.gmra.mrb[0].mxu0 %v123
    %v211 = vpop.f32.mrb[0].mxu0
    %v212 = vadd.f32 0.0, %v211
    %v213 = vpop.f32.mrb[0].mxu0
    %214 = vdwg.mxu0
    %216 = vset.pattern.permute.xlu0 0
    %217 = vperm.xlu0 %216, %v25
    %v218 = vpop.permute.xlu0 %217
    %221 = vset.pattern.permute.xlu0 0
    %222 = vperm.xlu0 %221, %v26
    %v223 = vpop.permute.xlu0 %222
    %226 = vset.pattern.permute.xlu0 0
    %227 = vperm.xlu0 %226, %v27
    %v228 = vpop.permute.xlu0 %227
    %231 = vset.pattern.permute.xlu0 0
    %232 = vperm.xlu0 %231, %v28
    %v233 = vpop.permute.xlu0 %232
    %v235 = vadd.f32 %v197, %v218
    %v236 = vadd.f32 %v202, %v223
    %v237 = vadd.f32 %v207, %v228
    %v238 = vadd.f32 %v212, %v233
    %239 = vxpose.xlu0.b32.start [1/16] %v192, 128
    %240 = vxpose.xlu0.b32.cont [2/16] 0.0, 128
    %241 = vxpose.xlu0.b32.cont [3/16] 0.0, 128
    %242 = vxpose.xlu0.b32.cont [4/16] 0.0, 128
    %243 = vxpose.xlu0.b32.cont [5/16] 0.0, 128
    %244 = vxpose.xlu0.b32.cont [6/16] 0.0, 128
    %245 = vxpose.xlu0.b32.cont [7/16] 0.0, 128
    %246 = vxpose.xlu0.b32.cont [8/16] 0.0, 128
    %247 = vxpose.xlu0.b32.cont [9/16] 0.0, 128
    %248 = vxpose.xlu0.b32.cont [10/16] 0.0, 128
    %249 = vxpose.xlu0.b32.cont [11/16] 0.0, 128
    %250 = vxpose.xlu0.b32.cont [12/16] 0.0, 128
    %251 = vxpose.xlu0.b32.cont [13/16] 0.0, 128
    %252 = vxpose.xlu0.b32.cont [14/16] 0.0, 128
    %253 = vxpose.xlu0.b32.cont [15/16] 0.0, 128
    %254 = vxpose.xlu0.b32.end [16/16] 0.0, 128
    %v255 = vpop.trf.xlu0
    %v256 = vpop.trf.xlu0
    %v257 = vpop.trf.xlu0
    %v258 = vpop.trf.xlu0
    %v259 = vpop.trf.xlu0
    %v260 = vpop.trf.xlu0
    %v261 = vpop.trf.xlu0
    %v262 = vpop.trf.xlu0
    %v263 = vpop.trf.xlu0
    %v264 = vpop.trf.xlu0
    %v265 = vpop.trf.xlu0
    %v266 = vpop.trf.xlu0
    %v267 = vpop.trf.xlu0
    %v268 = vpop.trf.xlu0
    %v269 = vpop.trf.xlu0
    %v270 = vpop.trf.xlu0
    %272 = vrot.lane.b32.xlu0 %v192, 96
    %v273 = vpop.permute.xlu0 %272
    %vm275 = vcmask 64512
    %v277 = vsel %vm275, %v255, 0
    %v280 = vsel %vm275, %v256, 0
    %282 = vmatprep.subr.mxu0 0.0
    %283 = vmatpush1.msra.mxu0 %v273
    %284 = vmatprep.subr.mxu0 0.0
    %285 = vmatpush1.msra.mxu0 0.0
    %286 = vmatprep.subr.mxu0 0.0
    %287 = vmatpush1.msra.mxu0 0.0
    %288 = vmatprep.subr.mxu0 0.0
    %289 = vmatpush1.msra.mxu0 0.0
    %290 = vmatprep.subr.mxu0 0.0
    %291 = vmatpush1.msra.mxu0 0.0
    %292 = vmatprep.subr.mxu0 0.0
    %293 = vmatpush1.msra.mxu0 0.0
    %294 = vmatprep.subr.mxu0 0.0
    %295 = vmatpush1.msra.mxu0 0.0
    %296 = vmatprep.subr.mxu0 0.0
    %297 = vmatpush1.msra.mxu0 0.0
    %298 = vmatprep.subr.mxu0 0.0
    %299 = vmatpush1.msra.mxu0 0.0
    %300 = vmatprep.subr.mxu0 0.0
    %301 = vmatpush1.msra.mxu0 0.0
    %302 = vmatprep.subr.mxu0 0.0
    %303 = vmatpush1.msra.mxu0 0.0
    %304 = vmatprep.subr.mxu0 0.0
    %305 = vmatpush1.msra.mxu0 0.0
    %306 = vmatprep.subr.mxu0 0.0
    %307 = vmatpush1.msra.mxu0 0.0
    %308 = vmatprep.subr.mxu0 0.0
    %309 = vmatpush1.msra.mxu0 0.0
    %310 = vmatprep.subr.mxu0 0.0
    %311 = vmatpush1.msra.mxu0 0.0
    %312 = vmatprep.subr.mxu0 0.0
    %313 = vmatpush1.msra.mxu0 0.0
    %314 = vmatprep.subr.mxu0 0.0
    %315 = vmatpush1.msra.mxu0 0.0
    %316 = vmatprep.subr.mxu0 0.0
    %317 = vmatpush1.msra.mxu0 0.0
    %318 = vmatprep.subr.mxu0 0.0
    %319 = vmatpush1.msra.mxu0 0.0
    %320 = vmatprep.subr.mxu0 0.0
    %321 = vmatpush1.msra.mxu0 0.0
    %322 = vmatprep.subr.mxu0 0.0
    %323 = vmatpush1.msra.mxu0 0.0
    %324 = vmatprep.subr.mxu0 0.0
    %325 = vmatpush1.msra.mxu0 0.0
    %326 = vmatprep.subr.mxu0 0.0
    %327 = vmatpush1.msra.mxu0 0.0
    %328 = vmatprep.subr.mxu0 0.0
    %329 = vmatpush1.msra.mxu0 0.0
    %330 = vmatprep.subr.mxu0 0.0
    %331 = vmatpush1.msra.mxu0 0.0
    %332 = vmatprep.subr.mxu0 0.0
    %333 = vmatpush1.msra.mxu0 0.0
    %334 = vmatprep.subr.mxu0 0.0
    %335 = vmatpush1.msra.mxu0 0.0
    %336 = vmatprep.subr.mxu0 0.0
    %337 = vmatpush1.msra.mxu0 0.0
    %338 = vmatprep.subr.mxu0 0.0
    %339 = vmatpush1.msra.mxu0 0.0
    %340 = vmatprep.subr.mxu0 0.0
    %341 = vmatpush1.msra.mxu0 0.0
    %342 = vmatprep.subr.mxu0 0.0
    %343 = vmatpush1.msra.mxu0 0.0
    %344 = vmatprep.subr.mxu0 0.0
    %345 = vmatpush1.msra.mxu0 0.0
    %346 = vmatprep.mubr.f32.mxu0 0.0
    %347 = vmatmul.mubr.f32.gmra.mrb[0].mxu0 %v277
    %v348 = vpop.f32.mrb[0].mxu0
    %v349 = vadd.f32 0.0, %v348
    %v350 = vpop.f32.mrb[0].mxu0
    %351 = vmatprep.mubr.f32.mxu0 0.0
    %352 = vmatmul.mubr.f32.gmra.mrb[0].mxu0 %v280
    %v353 = vpop.f32.mrb[0].mxu0
    %v354 = vadd.f32 0.0, %v353
    %v355 = vpop.f32.mrb[0].mxu0
    %356 = vdwg.mxu0
    %vm357 = vcmask 195584
    %v358 = vsel %vm357, %v349, 0.0
    %v359 = vsel %vm357, %v354, 0.0
    %v360 = vadd.f32 %v358, %v359
    %v361 = vrot.slane %v360, 4
    %v362 = vadd.f32 %v360, %v361
    %v363 = vrot.slane %v362, 2
    %v364 = vadd.f32 %v362, %v363
    %v365 = vrot.slane %v364, 1
    %v366 = vadd.f32 %v364, %v365
    %v367 = vadd.f32 %v366, 1e-09
    %v368 = vrcp.pop %v367
    %v369 = vmul.f32 %v349, %v368
    %v370 = vmul.f32 %v354, %v368
    %375 = vrot.lane.b32.xlu0 %v235, 96
    %v376 = vpop.permute.xlu0 %375
    %377 = vrot.lane.b32.xlu0 %v236, 96
    %v378 = vpop.permute.xlu0 %377
    %379 = vrot.lane.b32.xlu0 %v237, 96
    %v380 = vpop.permute.xlu0 %379
    %381 = vrot.lane.b32.xlu0 %v238, 96
    %v382 = vpop.permute.xlu0 %381
    %v383 = vsel %vm357, %v376, 0
    %v385 = vsel %vm357, %v378, 0
    %v387 = vsel %vm357, %v380, 0
    %v389 = vsel %vm357, %v382, 0
    %v392 = vsel %vm357, %v369, 0
    %v395 = vsel %vm357, %v370, 0
    %397 = vmatprep.subr.mxu0 0.0
    %398 = vmatpush1.xpose.msra.mxu0 %v392
    %399 = vmatprep.subr.mxu0 0.0
    %400 = vmatpush1.xpose.msra.mxu0 %v395
    %401 = vmatprep.subr.mxu0 0.0
    %402 = vmatpush1.xpose.msra.mxu0 0.0
    %403 = vmatprep.subr.mxu0 0.0
    %404 = vmatpush1.xpose.msra.mxu0 0.0
    %405 = vmatprep.subr.mxu0 0.0
    %406 = vmatpush1.xpose.msra.mxu0 0.0
    %407 = vmatprep.subr.mxu0 0.0
    %408 = vmatpush1.xpose.msra.mxu0 0.0
    %409 = vmatprep.subr.mxu0 0.0
    %410 = vmatpush1.xpose.msra.mxu0 0.0
    %411 = vmatprep.subr.mxu0 0.0
    %412 = vmatpush1.xpose.msra.mxu0 0.0
    %413 = vmatprep.subr.mxu0 0.0
    %414 = vmatpush1.xpose.msra.mxu0 0.0
    %415 = vmatprep.subr.mxu0 0.0
    %416 = vmatpush1.xpose.msra.mxu0 0.0
    %417 = vmatprep.subr.mxu0 0.0
    %418 = vmatpush1.xpose.msra.mxu0 0.0
    %419 = vmatprep.subr.mxu0 0.0
    %420 = vmatpush1.xpose.msra.mxu0 0.0
    %421 = vmatprep.subr.mxu0 0.0
    %422 = vmatpush1.xpose.msra.mxu0 0.0
    %423 = vmatprep.subr.mxu0 0.0
    %424 = vmatpush1.xpose.msra.mxu0 0.0
    %425 = vmatprep.subr.mxu0 0.0
    %426 = vmatpush1.xpose.msra.mxu0 0.0
    %427 = vmatprep.subr.mxu0 0.0
    %428 = vmatpush1.xpose.msra.mxu0 0.0
    %429 = vmatprep.subr.mxu0 0.0
    %430 = vmatpush1.xpose.msra.mxu0 0.0
    %431 = vmatprep.subr.mxu0 0.0
    %432 = vmatpush1.xpose.msra.mxu0 0.0
    %433 = vmatprep.subr.mxu0 0.0
    %434 = vmatpush1.xpose.msra.mxu0 0.0
    %435 = vmatprep.subr.mxu0 0.0
    %436 = vmatpush1.xpose.msra.mxu0 0.0
    %437 = vmatprep.subr.mxu0 0.0
    %438 = vmatpush1.xpose.msra.mxu0 0.0
    %439 = vmatprep.subr.mxu0 0.0
    %440 = vmatpush1.xpose.msra.mxu0 0.0
    %441 = vmatprep.subr.mxu0 0.0
    %442 = vmatpush1.xpose.msra.mxu0 0.0
    %443 = vmatprep.subr.mxu0 0.0
    %444 = vmatpush1.xpose.msra.mxu0 0.0
    %445 = vmatprep.subr.mxu0 0.0
    %446 = vmatpush1.xpose.msra.mxu0 0.0
    %447 = vmatprep.subr.mxu0 0.0
    %448 = vmatpush1.xpose.msra.mxu0 0.0
    %449 = vmatprep.subr.mxu0 0.0
    %450 = vmatpush1.xpose.msra.mxu0 0.0
    %451 = vmatprep.subr.mxu0 0.0
    %452 = vmatpush1.xpose.msra.mxu0 0.0
    %453 = vmatprep.subr.mxu0 0.0
    %454 = vmatpush1.xpose.msra.mxu0 0.0
    %455 = vmatprep.subr.mxu0 0.0
    %456 = vmatpush1.xpose.msra.mxu0 0.0
    %457 = vmatprep.subr.mxu0 0.0
    %458 = vmatpush1.xpose.msra.mxu0 0.0
    %459 = vmatprep.subr.mxu0 0.0
    %460 = vmatpush1.xpose.msra.mxu0 0.0
    %461 = vmatprep.mubr.f32.mxu0 0.0
    %462 = vmatmul.mubr.f32.gmra.mrb[0].mxu0 %v383
    %v463 = vpop.f32.mrb[0].mxu0
    %v464 = vadd.f32 0.0, %v463
    %v465 = vpop.f32.mrb[0].mxu0
    %466 = vmatprep.mubr.f32.mxu0 0.0
    %467 = vmatmul.mubr.f32.gmra.mrb[0].mxu0 %v385
    %v468 = vpop.f32.mrb[0].mxu0
    %v469 = vadd.f32 0.0, %v468
    %v470 = vpop.f32.mrb[0].mxu0
    %471 = vmatprep.mubr.f32.mxu0 0.0
    %472 = vmatmul.mubr.f32.gmra.mrb[0].mxu0 %v387
    %v473 = vpop.f32.mrb[0].mxu0
    %v474 = vadd.f32 0.0, %v473
    %v475 = vpop.f32.mrb[0].mxu0
    %476 = vmatprep.mubr.f32.mxu0 0.0
    %477 = vmatmul.mubr.f32.gmra.mrb[0].mxu0 %v389
    %v478 = vpop.f32.mrb[0].mxu0
    %v479 = vadd.f32 0.0, %v478
    %v480 = vpop.f32.mrb[0].mxu0
    %481 = vdwg.mxu0
    %482 = vst.msk [vmem:[%s4] sm:$0xff] %vm95, %v464
    %483 = vst.msk [vmem:[%s4 + $0x8] sm:$0xff] %vm95, %v469
    %484 = vst.msk [vmem:[%s4 + $0x10] sm:$0xff] %vm95, %v474
    %485 = vst.msk [vmem:[%s4 + $0x18] sm:$0xff] %vm95, %v479
    %486 = vst.msk [vmem:[#allocation2] sm:$0xff] %vm357, %v369
    %487 = vst.msk [vmem:[#allocation2 + $0x8] sm:$0xff] %vm357, %v370
    %488 = vrot.lane.b32.xlu0 %v192, 112
    %v489 = vpop.permute.xlu0 %488
    %491 = vxpose.xlu0.b32.start [1/16] %v489, 128
    %492 = vxpose.xlu0.b32.cont [2/16] 0.0, 128
    %493 = vxpose.xlu0.b32.cont [3/16] 0.0, 128
    %494 = vxpose.xlu0.b32.cont [4/16] 0.0, 128
    %495 = vxpose.xlu0.b32.cont [5/16] 0.0, 128
    %496 = vxpose.xlu0.b32.cont [6/16] 0.0, 128
    %497 = vxpose.xlu0.b32.cont [7/16] 0.0, 128
    %498 = vxpose.xlu0.b32.cont [8/16] 0.0, 128
    %499 = vxpose.xlu0.b32.cont [9/16] 0.0, 128
    %500 = vxpose.xlu0.b32.cont [10/16] 0.0, 128
    %501 = vxpose.xlu0.b32.cont [11/16] 0.0, 128
    %502 = vxpose.xlu0.b32.cont [12/16] 0.0, 128
    %503 = vxpose.xlu0.b32.cont [13/16] 0.0, 128
    %504 = vxpose.xlu0.b32.cont [14/16] 0.0, 128
    %505 = vxpose.xlu0.b32.cont [15/16] 0.0, 128
    %506 = vxpose.xlu0.b32.end [16/16] 0.0, 128
    %v507 = vpop.trf.xlu0
    %v508 = vpop.trf.xlu0
    %v509 = vpop.trf.xlu0
    %v510 = vpop.trf.xlu0
    %v511 = vpop.trf.xlu0
    %v512 = vpop.trf.xlu0
    %v513 = vpop.trf.xlu0
    %v514 = vpop.trf.xlu0
    %v515 = vpop.trf.xlu0
    %v516 = vpop.trf.xlu0
    %v517 = vpop.trf.xlu0
    %v518 = vpop.trf.xlu0
    %v519 = vpop.trf.xlu0
    %v520 = vpop.trf.xlu0
    %v521 = vpop.trf.xlu0
    %v522 = vpop.trf.xlu0
    %523 = vrot.lane.b32.xlu0 %v192, 72
    %v524 = vpop.permute.xlu0 %523
    %v527 = vsel %vm275, %v507, 0
    %v530 = vsel %vm275, %v508, 0
    %532 = vmatprep.subr.mxu0 0.0
    %533 = vmatpush1.msra.mxu0 %v524
    %534 = vmatprep.subr.mxu0 0.0
    %535 = vmatpush1.msra.mxu0 0.0
    %536 = vmatprep.subr.mxu0 0.0
    %537 = vmatpush1.msra.mxu0 0.0
    %538 = vmatprep.subr.mxu0 0.0
    %539 = vmatpush1.msra.mxu0 0.0
    %540 = vmatprep.subr.mxu0 0.0
    %541 = vmatpush1.msra.mxu0 0.0
    %542 = vmatprep.subr.mxu0 0.0
    %543 = vmatpush1.msra.mxu0 0.0
    %544 = vmatprep.subr.mxu0 0.0
    %545 = vmatpush1.msra.mxu0 0.0
    %546 = vmatprep.subr.mxu0 0.0
    %547 = vmatpush1.msra.mxu0 0.0
    %548 = vmatprep.subr.mxu0 0.0
    %549 = vmatpush1.msra.mxu0 0.0
    %550 = vmatprep.subr.mxu0 0.0
    %551 = vmatpush1.msra.mxu0 0.0
    %552 = vmatprep.subr.mxu0 0.0
    %553 = vmatpush1.msra.mxu0 0.0
    %554 = vmatprep.subr.mxu0 0.0
    %555 = vmatpush1.msra.mxu0 0.0
    %556 = vmatprep.subr.mxu0 0.0
    %557 = vmatpush1.msra.mxu0 0.0
    %558 = vmatprep.subr.mxu0 0.0
    %559 = vmatpush1.msra.mxu0 0.0
    %560 = vmatprep.subr.mxu0 0.0
    %561 = vmatpush1.msra.mxu0 0.0
    %562 = vmatprep.subr.mxu0 0.0
    %563 = vmatpush1.msra.mxu0 0.0
    %564 = vmatprep.subr.mxu0 0.0
    %565 = vmatpush1.msra.mxu0 0.0
    %566 = vmatprep.subr.mxu0 0.0
    %567 = vmatpush1.msra.mxu0 0.0
    %568 = vmatprep.subr.mxu0 0.0
    %569 = vmatpush1.msra.mxu0 0.0
    %570 = vmatprep.subr.mxu0 0.0
    %571 = vmatpush1.msra.mxu0 0.0
    %572 = vmatprep.subr.mxu0 0.0
    %573 = vmatpush1.msra.mxu0 0.0
    %574 = vmatprep.subr.mxu0 0.0
    %575 = vmatpush1.msra.mxu0 0.0
    %576 = vmatprep.subr.mxu0 0.0
    %577 = vmatpush1.msra.mxu0 0.0
    %578 = vmatprep.subr.mxu0 0.0
    %579 = vmatpush1.msra.mxu0 0.0
    %580 = vmatprep.subr.mxu0 0.0
    %581 = vmatpush1.msra.mxu0 0.0
    %582 = vmatprep.subr.mxu0 0.0
    %583 = vmatpush1.msra.mxu0 0.0
    %584 = vmatprep.subr.mxu0 0.0
    %585 = vmatpush1.msra.mxu0 0.0
    %586 = vmatprep.subr.mxu0 0.0
    %587 = vmatpush1.msra.mxu0 0.0
    %588 = vmatprep.subr.mxu0 0.0
    %589 = vmatpush1.msra.mxu0 0.0
    %590 = vmatprep.subr.mxu0 0.0
    %591 = vmatpush1.msra.mxu0 0.0
    %592 = vmatprep.subr.mxu0 0.0
    %593 = vmatpush1.msra.mxu0 0.0
    %594 = vmatprep.subr.mxu0 0.0
    %595 = vmatpush1.msra.mxu0 0.0
    %596 = vmatprep.mubr.f32.mxu0 0.0
    %597 = vmatmul.mubr.f32.gmra.mrb[0].mxu0 %v527
    %v598 = vpop.f32.mrb[0].mxu0
    %v599 = vadd.f32 0.0, %v598
    %v600 = vpop.f32.mrb[0].mxu0
    %601 = vmatprep.mubr.f32.mxu0 0.0
    %602 = vmatmul.mubr.f32.gmra.mrb[0].mxu0 %v530
    %v603 = vpop.f32.mrb[0].mxu0
    %v604 = vadd.f32 0.0, %v603
    %v605 = vpop.f32.mrb[0].mxu0
    %606 = vdwg.mxu0
    %v607 = vsel %vm357, %v599, 0.0
    %v608 = vsel %vm357, %v604, 0.0
    %v609 = vadd.f32 %v607, %v608
    %v610 = vrot.slane %v609, 4
    %v611 = vadd.f32 %v609, %v610
    %v612 = vrot.slane %v611, 2
    %v613 = vadd.f32 %v611, %v612
    %v614 = vrot.slane %v613, 1
    %v615 = vadd.f32 %v613, %v614
    %v616 = vadd.f32 %v615, 1e-09
    %v617 = vrcp.pop %v616
    %v618 = vmul.f32 %v599, %v617
    %v619 = vmul.f32 %v604, %v617
    %620 = vrot.lane.b32.xlu0 %v235, 72
    %v621 = vpop.permute.xlu0 %620
    %622 = vrot.lane.b32.xlu0 %v236, 72
    %v623 = vpop.permute.xlu0 %622
    %624 = vrot.lane.b32.xlu0 %v237, 72
    %v625 = vpop.permute.xlu0 %624
    %626 = vrot.lane.b32.xlu0 %v238, 72
    %v627 = vpop.permute.xlu0 %626
    %v628 = vsel %vm357, %v621, 0
    %v630 = vsel %vm357, %v623, 0
    %v632 = vsel %vm357, %v625, 0
    %v634 = vsel %vm357, %v627, 0
    %v637 = vsel %vm357, %v618, 0
    %v640 = vsel %vm357, %v619, 0
    %642 = vmatprep.subr.mxu0 0.0
    %643 = vmatpush1.xpose.msra.mxu0 %v637
    %644 = vmatprep.subr.mxu0 0.0
    %645 = vmatpush1.xpose.msra.mxu0 %v640
    %646 = vmatprep.subr.mxu0 0.0
    %647 = vmatpush1.xpose.msra.mxu0 0.0
    %648 = vmatprep.subr.mxu0 0.0
    %649 = vmatpush1.xpose.msra.mxu0 0.0
    %650 = vmatprep.subr.mxu0 0.0
    %651 = vmatpush1.xpose.msra.mxu0 0.0
    %652 = vmatprep.subr.mxu0 0.0
    %653 = vmatpush1.xpose.msra.mxu0 0.0
    %654 = vmatprep.subr.mxu0 0.0
    %655 = vmatpush1.xpose.msra.mxu0 0.0
    %656 = vmatprep.subr.mxu0 0.0
    %657 = vmatpush1.xpose.msra.mxu0 0.0
    %658 = vmatprep.subr.mxu0 0.0
    %659 = vmatpush1.xpose.msra.mxu0 0.0
    %660 = vmatprep.subr.mxu0 0.0
    %661 = vmatpush1.xpose.msra.mxu0 0.0
    %662 = vmatprep.subr.mxu0 0.0
    %663 = vmatpush1.xpose.msra.mxu0 0.0
    %664 = vmatprep.subr.mxu0 0.0
    %665 = vmatpush1.xpose.msra.mxu0 0.0
    %666 = vmatprep.subr.mxu0 0.0
    %667 = vmatpush1.xpose.msra.mxu0 0.0
    %668 = vmatprep.subr.mxu0 0.0
    %669 = vmatpush1.xpose.msra.mxu0 0.0
    %670 = vmatprep.subr.mxu0 0.0
    %671 = vmatpush1.xpose.msra.mxu0 0.0
    %672 = vmatprep.subr.mxu0 0.0
    %673 = vmatpush1.xpose.msra.mxu0 0.0
    %674 = vmatprep.subr.mxu0 0.0
    %675 = vmatpush1.xpose.msra.mxu0 0.0
    %676 = vmatprep.subr.mxu0 0.0
    %677 = vmatpush1.xpose.msra.mxu0 0.0
    %678 = vmatprep.subr.mxu0 0.0
    %679 = vmatpush1.xpose.msra.mxu0 0.0
    %680 = vmatprep.subr.mxu0 0.0
    %681 = vmatpush1.xpose.msra.mxu0 0.0
    %682 = vmatprep.subr.mxu0 0.0
    %683 = vmatpush1.xpose.msra.mxu0 0.0
    %684 = vmatprep.subr.mxu0 0.0
    %685 = vmatpush1.xpose.msra.mxu0 0.0
    %686 = vmatprep.subr.mxu0 0.0
    %687 = vmatpush1.xpose.msra.mxu0 0.0
    %688 = vmatprep.subr.mxu0 0.0
    %689 = vmatpush1.xpose.msra.mxu0 0.0
    %690 = vmatprep.subr.mxu0 0.0
    %691 = vmatpush1.xpose.msra.mxu0 0.0
    %692 = vmatprep.subr.mxu0 0.0
    %693 = vmatpush1.xpose.msra.mxu0 0.0
    %694 = vmatprep.subr.mxu0 0.0
    %695 = vmatpush1.xpose.msra.mxu0 0.0
    %696 = vmatprep.subr.mxu0 0.0
    %697 = vmatpush1.xpose.msra.mxu0 0.0
    %698 = vmatprep.subr.mxu0 0.0
    %699 = vmatpush1.xpose.msra.mxu0 0.0
    %700 = vmatprep.subr.mxu0 0.0
    %701 = vmatpush1.xpose.msra.mxu0 0.0
    %702 = vmatprep.subr.mxu0 0.0
    %703 = vmatpush1.xpose.msra.mxu0 0.0
    %704 = vmatprep.subr.mxu0 0.0
    %705 = vmatpush1.xpose.msra.mxu0 0.0
    %706 = vmatprep.mubr.f32.mxu0 0.0
    %707 = vmatmul.mubr.f32.gmra.mrb[0].mxu0 %v628
    %v708 = vpop.f32.mrb[0].mxu0
    %v709 = vadd.f32 0.0, %v708
    %v710 = vpop.f32.mrb[0].mxu0
    %711 = vmatprep.mubr.f32.mxu0 0.0
    %712 = vmatmul.mubr.f32.gmra.mrb[0].mxu0 %v630
    %v713 = vpop.f32.mrb[0].mxu0
    %v714 = vadd.f32 0.0, %v713
    %v715 = vpop.f32.mrb[0].mxu0
    %716 = vmatprep.mubr.f32.mxu0 0.0
    %717 = vmatmul.mubr.f32.gmra.mrb[0].mxu0 %v632
    %v718 = vpop.f32.mrb[0].mxu0
    %v719 = vadd.f32 0.0, %v718
    %v720 = vpop.f32.mrb[0].mxu0
    %721 = vmatprep.mubr.f32.mxu0 0.0
    %722 = vmatmul.mubr.f32.gmra.mrb[0].mxu0 %v634
    %v723 = vpop.f32.mrb[0].mxu0
    %v724 = vadd.f32 0.0, %v723
    %v725 = vpop.f32.mrb[0].mxu0
    %726 = vdwg.mxu0
    %s727 = scalar_lea.vmem %s4, 32
    %728 = vst.msk [vmem:[%s727] sm:$0xff] %vm95, %v709
    %729 = vst.msk [vmem:[%s727 + $0x8] sm:$0xff] %vm95, %v714
    %730 = vst.msk [vmem:[%s727 + $0x10] sm:$0xff] %vm95, %v719
    %731 = vst.msk [vmem:[%s727 + $0x18] sm:$0xff] %vm95, %v724
    %s732 = scalar_lea.vmem [#allocation2], 16
    %733 = vst.msk [vmem:[%s732] sm:$0xff] %vm357, %v618
    %734 = vst.msk [vmem:[%s732 + $0x8] sm:$0xff] %vm357, %v619
    // Predicated region
    $region18: #{tpu_custom_call.1} parent=1 // pred_check
      _
    $region19: #{tpu_custom_call.1} parent=1 // pred_check_branch
      %736 = sbr.rel (0) target = $region21
    $region20: #{tpu_custom_call.1} parent=1 // pred_region
      _
    $region21: #{tpu_custom_call.1} parent=1 // pred_fallthru
      _
    // Predicated region
    $region22: #{tpu_custom_call.1} parent=1 // pred_check
      _
    $region23: #{tpu_custom_call.1} parent=1 // pred_check_branch
      %738 = sbr.rel (0) target = $region25
    $region24: #{tpu_custom_call.1} parent=1 // pred_region
      %s740 = ssub.s32 512, 512
      %741 = vsyncadd [#allocation3], %s740
      %s742 = sshll.u32 [#allocation2], 4
      %s743 = int_to_ptr.vmem [resolvable:$true] %s742
      %748 = dma.vmem_to_hbm [thread:$0]  %s743, 512, %s5, [#allocation3], 128, 128, 8
    $region25: #{tpu_custom_call.1} parent=1 // pred_fallthru
      _
    // Predicated region
    $region26: #{tpu_custom_call.1} parent=1 // pred_check
      _
    $region27: #{tpu_custom_call.1} parent=1 // pred_check_branch
      %750 = sbr.rel (0) target = $region29
    $region28: #{tpu_custom_call.1} parent=1 // pred_region
      _
    $region29: #{tpu_custom_call.1} parent=1 // pred_fallthru
      _
    // Predicated region
    $region30: #{tpu_custom_call.1} parent=1 // pred_check
      _
    $region31: #{tpu_custom_call.1} parent=1 // pred_check_branch
      %752 = sbr.rel (0) target = $region33
    $region32: #{tpu_custom_call.1} parent=1 // pred_region
      %753 = dma.done [#allocation3], 512
    $region33: #{tpu_custom_call.1} parent=1 // pred_fallthru
      _
    %754 = vsyncpa [#allocation3], 1

</llo_original>
